<compile_context>
chip_gen: v5e
topology: v5e:2x2
jax: 0.10.0
libtpu: 0.0.40
codegen_flags: <defaults>
</compile_context>

<pallas_src>
import functools
import math

import jax
import jax.numpy as jnp
from jax.experimental import pallas as pl
from jax.experimental.pallas import tpu as pltpu


def _attract_encoder_kernel(x_ref, w_ref, b_ref, o_ref, *, clamp_min):
    # x_ref: [bm, fold*F]        streamed input tile (lane dense)
    # w_ref: [fold*F, fold*n_ch] block-diagonal W.T (grid-invariant)
    # b_ref: [1, fold*n_ch]      tiled bias (grid-invariant)
    # o_ref: [bm, fold*n_ch]     output tile (lane dense -> unmasked stores)
    x = x_ref[...]
    w = w_ref[...]
    if x.dtype != w.dtype:
        x = x.astype(w.dtype)          # bf16 MXU operands when mxu_bf16=True
    y = jnp.dot(x, w, preferred_element_type=jnp.float32)   # f32 accumulate
    y = y + b_ref[...].astype(jnp.float32)
    y = jax.nn.sigmoid(y)
    y = jnp.maximum(y, clamp_min)
    o_ref[...] = y.astype(o_ref.dtype)


def _pow2_floor(n):
    n = int(n)
    return 1 << (n.bit_length() - 1) if n >= 1 else 1


def _const_spec(block_shape, index_map):
    """Grid-invariant operand: single pipeline buffer (saves VMEM)."""
    try:
        return pl.BlockSpec(block_shape, index_map, pipeline_mode=pl.Buffered(1))
    except (TypeError, AttributeError):
        return pl.BlockSpec(block_shape, index_map)


def _auto_block_rows(m_rows, row_bytes, sublane, target_tile_bytes):
    """Pick the row-tile size.

    Never collapses to a single grid step when the row axis is big enough to
    split: aims for >= 4 grid steps (DMA/compute overlap + both v7x TCs),
    capped by a ~target_tile_bytes input tile.
    """
    if m_rows < 4 * sublane:
        return m_rows                                # too small to split
    bm_bytes = max(sublane, target_tile_bytes // max(row_bytes, 1))
    bm_split = -(-m_rows // 4)                       # cdiv: >= 4 steps
    bm = min(bm_bytes, bm_split)
    bm = max(sublane, (bm // sublane) * sublane)
    return min(bm, m_rows)


def make_attract_encoder(weight, bias, *, mxu_bf16=True, block_rows=None,
                         target_tile_bytes=4 << 20, max_weight_bytes=4 << 20):
    """Build a forward fn for AttractEncoder with the folded weight precomputed.

    weight: [n_ch, F] (nn.Linear weight), bias: [n_ch].
    Returns forward(attract: [..., F]) -> [..., n_ch].
    """
    weight = jnp.asarray(weight)
    bias = jnp.asarray(bias)
    n_ch, feat = weight.shape
    clamp_min = 1.0 / n_ch

    w_store_itemsize = 2 if mxu_bf16 else jnp.dtype(weight.dtype).itemsize

    # Lane-fold factor: power of two so the weight-size cap loop preserves it,
    # sized so fold*n_ch ~ one 128-lane vreg.
    fold = _pow2_floor(max(1, 128 // n_ch)) if n_ch < 128 else 1
    while fold > 1 and (fold * feat) * (fold * n_ch) * w_store_itemsize > max_weight_bytes:
        fold //= 2
    f_in, f_out = fold * feat, fold * n_ch

    # Block-diagonal W.T (fold copies on the diagonal) + tiled bias.
    # Built once here (hoisted out of the per-call path).
    wt = weight.T.astype(jnp.float32)                       # [F, n_ch]
    eye = jnp.eye(fold, dtype=jnp.float32)
    w_bd = jnp.einsum("ij,fc->ifjc", eye, wt).reshape(f_in, f_out)
    w_bd = w_bd.astype(jnp.bfloat16 if mxu_bf16 else weight.dtype)
    b_bd = jnp.tile(bias.astype(jnp.float32), fold).reshape(1, f_out)
    w_bd = jax.device_put(w_bd)
    b_bd = jax.device_put(b_bd)
    w_bytes = w_bd.size * jnp.dtype(w_bd.dtype).itemsize + b_bd.size * 4

    @jax.jit
    def _fwd(attract, w_bd_arg, b_bd_arg):
        assert attract.shape[-1] == feat, "last dim must be n_fft//2"
        orig_shape = attract.shape
        x2d = attract.reshape(-1, feat)                     # [M, F]
        m = x2d.shape[0]
        itemsize = jnp.dtype(attract.dtype).itemsize

        # Pad <= fold-1 zero rows so the lane-dense fold never collapses
        # (keeps f_out >= 128 -> unmasked stores) and fold stays constant
        # (so the precomputed folded weight is reused).
        m_pad = ((m + fold - 1) // fold) * fold
        if m_pad != m:
            x2d = jnp.pad(x2d, ((0, m_pad - m), (0, 0)))
        m_rows = m_pad // fold
        x_f = x2d.reshape(m_rows, f_in)                     # free row-major view

        # Sublane packing: 8 rows/vreg for f32, 16 for bf16, 32 for 8-bit.
        sub = max(8, 32 // itemsize)
        row_bytes = f_in * itemsize
        if block_rows is not None:
            bm = min(int(block_rows), m_rows)
            if bm < m_rows:
                bm = max(sub, (bm // sub) * sub)
        else:
            bm = _auto_block_rows(m_rows, row_bytes, sub, target_tile_bytes)
        bm = min(bm, m_rows)

        grid = (pl.cdiv(m_rows, bm),)

        cost = pl.CostEstimate(
            flops=2 * m * feat * n_ch,                      # useful flops
            transcendentals=m * n_ch,                       # sigmoid
            bytes_accessed=(m_pad * feat * itemsize         # x read
                            + m_pad * n_ch * itemsize       # out write
                            + w_bytes),                     # resident weight/bias
        )

        out_f = pl.pallas_call(
            functools.partial(_attract_encoder_kernel, clamp_min=clamp_min),
            out_shape=jax.ShapeDtypeStruct((m_rows, f_out), attract.dtype),
            grid=grid,
            in_specs=[
                pl.BlockSpec((bm, f_in), lambda i: (i, 0)),      # streamed x tiles
                _const_spec((f_in, f_out), lambda i: (0, 0)),    # resident weight
                _const_spec((1, f_out), lambda i: (0, 0)),       # resident bias
            ],
            out_specs=pl.BlockSpec((bm, f_out), lambda i: (i, 0)),
            compiler_params=pltpu.CompilerParams(
                dimension_semantics=("parallel",),
                vmem_limit_bytes=32 << 20),
            cost_estimate=cost,
        )(x_f, w_bd_arg, b_bd_arg)

        out = out_f.reshape(m_pad, n_ch)
        if m_pad != m:
            out = out[:m]
        return out.reshape(*orig_shape[:-1], n_ch)

    def forward(attract):
        return _fwd(attract, w_bd, b_bd)

    return forward


if __name__ == "__main__":
    n_ch = 4
    n_fft = 64                          # -> feature dim 32 (small demo)
    feat = n_fft // 2

    key = jax.random.PRNGKey(0)
    k_in, kw, kb = jax.random.split(key, 3)

    # nn.Linear-style init: uniform(-k, k), k = 1/sqrt(fan_in)
    k_lin = 1.0 / math.sqrt(feat)
    weight = jax.random.uniform(kw, (n_ch, feat), jnp.float32, -k_lin, k_lin)
    bias = jax.random.uniform(kb, (n_ch,), jnp.float32, -k_lin, k_lin)

    def reference(x):
        return jnp.maximum(jax.nn.sigmoid(x @ weight.T + bias), 1.0 / n_ch)

    enc_bf16 = make_attract_encoder(weight, bias, mxu_bf16=True)          # default path
    enc_bf16_blk = make_attract_encoder(weight, bias, mxu_bf16=True, block_rows=8)
    enc_f32 = make_attract_encoder(weight, bias, mxu_bf16=False)          # exact path

    # Cases: full fold single block; padded-fold (M % fold != 0); forced
    # multi-block grid; auto >=4-way grid split; exact f32 MXU path.
    cases = [
        ((2, 16, feat), enc_bf16, 1e-2),      # M=32
        ((3, 8, feat), enc_bf16, 1e-2),       # M=24 -> padded to 32
        ((2, 256, feat), enc_bf16_blk, 1e-2), # M=512, grid=2
        ((8, 1024, feat), enc_bf16, 1e-2),    # M=8192, grid=4
        ((2, 256, feat), enc_f32, 1e-5),      # f32 operands, tight tolerance
    ]
    for i, (shape, enc, tol) in enumerate(cases):
        x = jax.random.normal(jax.random.fold_in(k_in, i), shape, dtype=jnp.float32)
        out = jax.block_until_ready(enc(x))
        ref = reference(x)
        assert out.shape == shape[:-1] + (n_ch,), f"shape mismatch in case {i}"
        err = float(jnp.max(jnp.abs(out - ref)))
        assert err <= tol, f"mismatch in case {i}: max_err={err}"

    print("KERNEL_OK")
</pallas_src>

<mosaic_0001>
module attributes {stable_mosaic.version = 11 : i64} {
  func.func @_attract_encoder_kernel(%arg0: i32, %arg1: memref<1x1024xf32, #tpu.memory_space<vmem>>, %arg2: memref<1024x128xbf16, #tpu.memory_space<vmem>>, %arg3: memref<1x128xf32, #tpu.memory_space<vmem>>, %arg4: memref<1x128xf32, #tpu.memory_space<vmem>>) attributes {dimension_semantics = [#tpu.dimension_semantics<parallel>], iteration_bounds = array<i64: 1>, scalar_prefetch = 0 : i64, scratch_operands = 0 : i64, tpu.core_type = #tpu.core_type<tc>, window_params = [{transform_indices = @transform_0, window_bounds = array<i64: 1, 1024>}, {pipeline_mode = #tpu.pipeline_mode<synchronous>, transform_indices = @transform_1, window_bounds = array<i64: 1024, 128>}, {pipeline_mode = #tpu.pipeline_mode<synchronous>, transform_indices = @transform_2, window_bounds = array<i64: 1, 128>}, {transform_indices = @transform_3, window_bounds = array<i64: 1, 128>}]} {
    %c0 = arith.constant 0 : index
    %c0_0 = arith.constant 0 : index
    %0 = vector.load %arg1[%c0, %c0_0] : memref<1x1024xf32, #tpu.memory_space<vmem>>, vector<1x1024xf32>
    %c0_1 = arith.constant 0 : index
    %c0_2 = arith.constant 0 : index
    %1 = vector.load %arg2[%c0_1, %c0_2] : memref<1024x128xbf16, #tpu.memory_space<vmem>>, vector<1024x128xbf16>
    %2 = arith.truncf %0 : vector<1x1024xf32> to vector<1x1024xbf16>
    %cst = arith.constant dense<0.000000e+00> : vector<1x128xf32>
    %3 = tpu.matmul %2, %1, %cst {dimension_numbers = #tpu.dot_dimension_numbers<[1], [0], [0], [1], [0, 0, 1, 1], [], []>} : vector<1x1024xbf16>, vector<1024x128xbf16>, vector<1x128xf32> -> vector<1x128xf32>
    %c0_3 = arith.constant 0 : index
    %c0_4 = arith.constant 0 : index
    %4 = vector.load %arg3[%c0_3, %c0_4] : memref<1x128xf32, #tpu.memory_space<vmem>>, vector<1x128xf32>
    %5 = arith.addf %3, %4 : vector<1x128xf32>
    %6 = arith.negf %5 : vector<1x128xf32>
    %7 = math.exp %6 : vector<1x128xf32>
    %cst_5 = arith.constant 1.000000e+00 : f32
    %8 = vector.broadcast %cst_5 : f32 to vector<1x128xf32>
    %9 = arith.addf %8, %7 : vector<1x128xf32>
    %10 = arith.divf %8, %9 : vector<1x128xf32>
    %cst_6 = arith.constant 2.500000e-01 : f32
    %11 = vector.broadcast %cst_6 : f32 to vector<1x128xf32>
    %12 = arith.maximumf %10, %11 : vector<1x128xf32>
    %c0_7 = arith.constant 0 : index
    %c0_8 = arith.constant 0 : index
    %13 = vector.load %arg4[%c0_7, %c0_8] : memref<1x128xf32, #tpu.memory_space<vmem>>, vector<1x128xf32>
    tpu.vector_store %arg4[%c0_7, %c0_8], %12 {strides = array<i32>} : memref<1x128xf32, #tpu.memory_space<vmem>>, vector<1x128xf32>,
    return
  }
  func.func @transform_0(%arg0: i32) -> (i32, i32) {
    %c0_i32 = arith.constant 0 : i32
    %c0_i32_0 = arith.constant 0 : i32
    return %arg0, %c0_i32 : i32, i32
  }
  func.func @transform_1(%arg0: i32) -> (i32, i32) {
    %c0_i32 = arith.constant 0 : i32
    %c0_i32_0 = arith.constant 0 : i32
    %c0_i32_1 = arith.constant 0 : i32
    return %c0_i32, %c0_i32_0 : i32, i32
  }
  func.func @transform_2(%arg0: i32) -> (i32, i32) {
    %c0_i32 = arith.constant 0 : i32
    %c0_i32_0 = arith.constant 0 : i32
    %c0_i32_1 = arith.constant 0 : i32
    return %c0_i32, %c0_i32_0 : i32, i32
  }
  func.func @transform_3(%arg0: i32) -> (i32, i32) {
    %c0_i32 = arith.constant 0 : i32
    %c0_i32_0 = arith.constant 0 : i32
    return %arg0, %c0_i32 : i32, i32
  }
}

</mosaic_0001>

<llo_original>
// kernel: _fwd.1
$region0: #{_fwd.1}
  #allocation0 [shape = 'u32[]', space=smem, size = 0x4, offset = 0x4, fixed_abs, tag = 'smem constant byte address 0x4 - core index']
  #allocation1 [shape = 'u32[72,128]{1,0:T(1,128)}', space=vmem, size = 0x9000, scoped, tag = 'internal scratch']
  %s0 = inlined_call_operand.vmem [shape: f32[1,1024], index: 0, kind: input, shape index: {}]
  %s1 = inlined_call_operand.hbm [shape: bf16[1024,128], index: 1, kind: input, shape index: {}]
  %s2 = inlined_call_operand.vmem [shape: f32[1,128], index: 2, kind: input, shape index: {}]
  %s3 = inlined_call_operand.vmem [shape: f32[1,128], index: 3, kind: output, shape index: {}]
  %s4 = sld [smem:[#allocation0]]
  $region26: #{_fwd.1} parent=0
    _
  %s6 = ssub.s32 1, %s4
  %s7 = scalar_select 0, %s6, %s4
  $region1: #{_fwd.1} parent=0
    #allocation2 [shape = 'u8[262144]{0}', space=vmem, size = 0x40000, scoped, tag = 'input window, operand 1, single buffered']
    #allocation3 [shape = 's32[1]{0}', space=sflag, size = 0x4, scoped, tag = 'scoped memory for _fwd.1']
    %8 = vsyncpa [#allocation3], 0
    // Predicated region
    $region2: #{_fwd.1} parent=1 // pred_check
      _
    $region3: #{_fwd.1} parent=1 // pred_check_branch
      %10 = sbr.rel (0) target = $region5
    $region4: #{_fwd.1} parent=1 // pred_region
      _
    $region5: #{_fwd.1} parent=1 // pred_fallthru
      _
    // Predicated region
    $region6: #{_fwd.1} parent=1 // pred_check
      _
    $region7: #{_fwd.1} parent=1 // pred_check_branch
      %12 = sbr.rel (0) target = $region9
    $region8: #{_fwd.1} parent=1 // pred_region
      %14 = vsyncadd [#allocation3], 0
      %s15 = sshll.u32 %s1, 4
      %s16 = int_to_ptr.hbm [resolvable:$true] %s15
      %s17 = sshll.u32 [#allocation2], 4
      %s18 = int_to_ptr.vmem [resolvable:$true] %s17
      %23 = dma.hbm_to_vmem [thread:$0]  %s16, 8192, %s18, [#allocation3], 64, 64, 4
    $region9: #{_fwd.1} parent=1 // pred_fallthru
      _
    // Predicated region
    $region10: #{_fwd.1} parent=1 // pred_check
      _
    $region11: #{_fwd.1} parent=1 // pred_check_branch
      %25 = sbr.rel (0) target = $region13
    $region12: #{_fwd.1} parent=1 // pred_region
      _
    $region13: #{_fwd.1} parent=1 // pred_fallthru
      _
    // Predicated region
    $region14: #{_fwd.1} parent=1 // pred_check
      _
    $region15: #{_fwd.1} parent=1 // pred_check_branch
      %27 = sbr.rel (0) target = $region17
    $region16: #{_fwd.1} parent=1 // pred_region
      %29 = dma.done [#allocation3], 8192
    $region17: #{_fwd.1} parent=1 // pred_fallthru
      _
    %v30 = vld [vmem:[%s0] sm:$0xff]
    %v31 = vld [vmem:[#allocation2] sm:$0xf]
    %v32 = vld [vmem:[#allocation2 + $0x4] sm:$0xf]
    %v33 = vld [vmem:[#allocation2 + $0x8] sm:$0xf]
    %v34 = vld [vmem:[#allocation2 + $0xc] sm:$0xf]
    %v35 = vld [vmem:[#allocation2 + $0x10] sm:$0xf]
    %v36 = vld [vmem:[#allocation2 + $0x14] sm:$0xf]
    %v37 = vld [vmem:[#allocation2 + $0x18] sm:$0xf]
    %v38 = vld [vmem:[#allocation2 + $0x1c] sm:$0xf]
    %v39 = vld [vmem:[#allocation2 + $0x20] sm:$0xf]
    %v40 = vld [vmem:[#allocation2 + $0x24] sm:$0xf]
    %v41 = vld [vmem:[#allocation2 + $0x28] sm:$0xf]
    %v42 = vld [vmem:[#allocation2 + $0x2c] sm:$0xf]
    %v43 = vld [vmem:[#allocation2 + $0x30] sm:$0xf]
    %v44 = vld [vmem:[#allocation2 + $0x34] sm:$0xf]
    %v45 = vld [vmem:[#allocation2 + $0x38] sm:$0xf]
    %v46 = vld [vmem:[#allocation2 + $0x3c] sm:$0xf]
    %v47 = vld [vmem:[#allocation2 + $0x40] sm:$0xf]
    %v48 = vld [vmem:[#allocation2 + $0x44] sm:$0xf]
    %v49 = vld [vmem:[#allocation2 + $0x48] sm:$0xf]
    %v50 = vld [vmem:[#allocation2 + $0x4c] sm:$0xf]
    %v51 = vld [vmem:[#allocation2 + $0x50] sm:$0xf]
    %v52 = vld [vmem:[#allocation2 + $0x54] sm:$0xf]
    %v53 = vld [vmem:[#allocation2 + $0x58] sm:$0xf]
    %v54 = vld [vmem:[#allocation2 + $0x5c] sm:$0xf]
    %v55 = vld [vmem:[#allocation2 + $0x60] sm:$0xf]
    %v56 = vld [vmem:[#allocation2 + $0x64] sm:$0xf]
    %v57 = vld [vmem:[#allocation2 + $0x68] sm:$0xf]
    %v58 = vld [vmem:[#allocation2 + $0x6c] sm:$0xf]
    %v59 = vld [vmem:[#allocation2 + $0x70] sm:$0xf]
    %v60 = vld [vmem:[#allocation2 + $0x74] sm:$0xf]
    %v61 = vld [vmem:[#allocation2 + $0x78] sm:$0xf]
    %v62 = vld [vmem:[#allocation2 + $0x7c] sm:$0xf]
    %v63 = vld [vmem:[#allocation2 + $0x80] sm:$0xf]
    %v64 = vld [vmem:[#allocation2 + $0x84] sm:$0xf]
    %v65 = vld [vmem:[#allocation2 + $0x88] sm:$0xf]
    %v66 = vld [vmem:[#allocation2 + $0x8c] sm:$0xf]
    %v67 = vld [vmem:[#allocation2 + $0x90] sm:$0xf]
    %v68 = vld [vmem:[#allocation2 + $0x94] sm:$0xf]
    %v69 = vld [vmem:[#allocation2 + $0x98] sm:$0xf]
    %v70 = vld [vmem:[#allocation2 + $0x9c] sm:$0xf]
    %v71 = vld [vmem:[#allocation2 + $0xa0] sm:$0xf]
    %v72 = vld [vmem:[#allocation2 + $0xa4] sm:$0xf]
    %v73 = vld [vmem:[#allocation2 + $0xa8] sm:$0xf]
    %v74 = vld [vmem:[#allocation2 + $0xac] sm:$0xf]
    %v75 = vld [vmem:[#allocation2 + $0xb0] sm:$0xf]
    %v76 = vld [vmem:[#allocation2 + $0xb4] sm:$0xf]
    %v77 = vld [vmem:[#allocation2 + $0xb8] sm:$0xf]
    %v78 = vld [vmem:[#allocation2 + $0xbc] sm:$0xf]
    %v79 = vld [vmem:[#allocation2 + $0xc0] sm:$0xf]
    %v80 = vld [vmem:[#allocation2 + $0xc4] sm:$0xf]
    %v81 = vld [vmem:[#allocation2 + $0xc8] sm:$0xf]
    %v82 = vld [vmem:[#allocation2 + $0xcc] sm:$0xf]
    %v83 = vld [vmem:[#allocation2 + $0xd0] sm:$0xf]
    %v84 = vld [vmem:[#allocation2 + $0xd4] sm:$0xf]
    %v85 = vld [vmem:[#allocation2 + $0xd8] sm:$0xf]
    %v86 = vld [vmem:[#allocation2 + $0xdc] sm:$0xf]
    %v87 = vld [vmem:[#allocation2 + $0xe0] sm:$0xf]
    %v88 = vld [vmem:[#allocation2 + $0xe4] sm:$0xf]
    %v89 = vld [vmem:[#allocation2 + $0xe8] sm:$0xf]
    %v90 = vld [vmem:[#allocation2 + $0xec] sm:$0xf]
    %v91 = vld [vmem:[#allocation2 + $0xf0] sm:$0xf]
    %v92 = vld [vmem:[#allocation2 + $0xf4] sm:$0xf]
    %v93 = vld [vmem:[#allocation2 + $0xf8] sm:$0xf]
    %v94 = vld [vmem:[#allocation2 + $0xfc] sm:$0xf]
    %v95 = vld [vmem:[#allocation2 + $0x100] sm:$0xf]
    %v96 = vld [vmem:[#allocation2 + $0x104] sm:$0xf]
    %v97 = vld [vmem:[#allocation2 + $0x108] sm:$0xf]
    %v98 = vld [vmem:[#allocation2 + $0x10c] sm:$0xf]
    %v99 = vld [vmem:[#allocation2 + $0x110] sm:$0xf]
    %v100 = vld [vmem:[#allocation2 + $0x114] sm:$0xf]
    %v101 = vld [vmem:[#allocation2 + $0x118] sm:$0xf]
    %v102 = vld [vmem:[#allocation2 + $0x11c] sm:$0xf]
    %v103 = vld [vmem:[#allocation2 + $0x120] sm:$0xf]
    %v104 = vld [vmem:[#allocation2 + $0x124] sm:$0xf]
    %v105 = vld [vmem:[#allocation2 + $0x128] sm:$0xf]
    %v106 = vld [vmem:[#allocation2 + $0x12c] sm:$0xf]
    %v107 = vld [vmem:[#allocation2 + $0x130] sm:$0xf]
    %v108 = vld [vmem:[#allocation2 + $0x134] sm:$0xf]
    %v109 = vld [vmem:[#allocation2 + $0x138] sm:$0xf]
    %v110 = vld [vmem:[#allocation2 + $0x13c] sm:$0xf]
    %v111 = vld [vmem:[#allocation2 + $0x140] sm:$0xf]
    %v112 = vld [vmem:[#allocation2 + $0x144] sm:$0xf]
    %v113 = vld [vmem:[#allocation2 + $0x148] sm:$0xf]
    %v114 = vld [vmem:[#allocation2 + $0x14c] sm:$0xf]
    %v115 = vld [vmem:[#allocation2 + $0x150] sm:$0xf]
    %v116 = vld [vmem:[#allocation2 + $0x154] sm:$0xf]
    %v117 = vld [vmem:[#allocation2 + $0x158] sm:$0xf]
    %v118 = vld [vmem:[#allocation2 + $0x15c] sm:$0xf]
    %v119 = vld [vmem:[#allocation2 + $0x160] sm:$0xf]
    %v120 = vld [vmem:[#allocation2 + $0x164] sm:$0xf]
    %v121 = vld [vmem:[#allocation2 + $0x168] sm:$0xf]
    %v122 = vld [vmem:[#allocation2 + $0x16c] sm:$0xf]
    %v123 = vld [vmem:[#allocation2 + $0x170] sm:$0xf]
    %v124 = vld [vmem:[#allocation2 + $0x174] sm:$0xf]
    %v125 = vld [vmem:[#allocation2 + $0x178] sm:$0xf]
    %v126 = vld [vmem:[#allocation2 + $0x17c] sm:$0xf]
    %v127 = vld [vmem:[#allocation2 + $0x180] sm:$0xf]
    %v128 = vld [vmem:[#allocation2 + $0x184] sm:$0xf]
    %v129 = vld [vmem:[#allocation2 + $0x188] sm:$0xf]
    %v130 = vld [vmem:[#allocation2 + $0x18c] sm:$0xf]
    %v131 = vld [vmem:[#allocation2 + $0x190] sm:$0xf]
    %v132 = vld [vmem:[#allocation2 + $0x194] sm:$0xf]
    %v133 = vld [vmem:[#allocation2 + $0x198] sm:$0xf]
    %v134 = vld [vmem:[#allocation2 + $0x19c] sm:$0xf]
    %v135 = vld [vmem:[#allocation2 + $0x1a0] sm:$0xf]
    %v136 = vld [vmem:[#allocation2 + $0x1a4] sm:$0xf]
    %v137 = vld [vmem:[#allocation2 + $0x1a8] sm:$0xf]
    %v138 = vld [vmem:[#allocation2 + $0x1ac] sm:$0xf]
    %v139 = vld [vmem:[#allocation2 + $0x1b0] sm:$0xf]
    %v140 = vld [vmem:[#allocation2 + $0x1b4] sm:$0xf]
    %v141 = vld [vmem:[#allocation2 + $0x1b8] sm:$0xf]
    %v142 = vld [vmem:[#allocation2 + $0x1bc] sm:$0xf]
    %v143 = vld [vmem:[#allocation2 + $0x1c0] sm:$0xf]
    %v144 = vld [vmem:[#allocation2 + $0x1c4] sm:$0xf]
    %v145 = vld [vmem:[#allocation2 + $0x1c8] sm:$0xf]
    %v146 = vld [vmem:[#allocation2 + $0x1cc] sm:$0xf]
    %v147 = vld [vmem:[#allocation2 + $0x1d0] sm:$0xf]
    %v148 = vld [vmem:[#allocation2 + $0x1d4] sm:$0xf]
    %v149 = vld [vmem:[#allocation2 + $0x1d8] sm:$0xf]
    %v150 = vld [vmem:[#allocation2 + $0x1dc] sm:$0xf]
    %v151 = vld [vmem:[#allocation2 + $0x1e0] sm:$0xf]
    %v152 = vld [vmem:[#allocation2 + $0x1e4] sm:$0xf]
    %v153 = vld [vmem:[#allocation2 + $0x1e8] sm:$0xf]
    %v154 = vld [vmem:[#allocation2 + $0x1ec] sm:$0xf]
    %v155 = vld [vmem:[#allocation2 + $0x1f0] sm:$0xf]
    %v156 = vld [vmem:[#allocation2 + $0x1f4] sm:$0xf]
    %v157 = vld [vmem:[#allocation2 + $0x1f8] sm:$0xf]
    %v158 = vld [vmem:[#allocation2 + $0x1fc] sm:$0xf]
    %v160 = vperm.slane %v30, 0
    %v161 = vperm.slane %v30, 1
    %v162 = vperm.slane %v30, 2
    %v163 = vperm.slane %v30, 3
    %v164 = vperm.slane %v30, 4
    %v165 = vperm.slane %v30, 5
    %v166 = vperm.slane %v30, 6
    %v167 = vperm.slane %v30, 7
    %v176 = vpack.c.bf16 %v160, %v160
    %v177 = vpack.c.bf16 %v161, %v161
    %v178 = vpack.c.bf16 %v162, %v162
    %v179 = vpack.c.bf16 %v163, %v163
    %v180 = vpack.c.bf16 %v164, %v164
    %v181 = vpack.c.bf16 %v165, %v165
    %v182 = vpack.c.bf16 %v166, %v166
    %v183 = vpack.c.bf16 %v167, %v167
    %v184 = vld [vmem:[%s2] sm:$0x1]
    %v313 = vunpack.c.l.b16 %v31
    %v314 = vunpack.c.l.b16 %v32
    %v315 = vunpack.c.l.b16 %v33
    %v316 = vunpack.c.l.b16 %v34
    %v317 = vunpack.c.l.b16 %v35
    %v318 = vunpack.c.l.b16 %v36
    %v319 = vunpack.c.l.b16 %v37
    %v320 = vunpack.c.l.b16 %v38
    %v321 = vunpack.c.l.b16 %v39
    %v322 = vunpack.c.l.b16 %v40
    %v323 = vunpack.c.l.b16 %v41
    %v324 = vunpack.c.l.b16 %v42
    %v325 = vunpack.c.l.b16 %v43
    %v326 = vunpack.c.l.b16 %v44
    %v327 = vunpack.c.l.b16 %v45
    %v328 = vunpack.c.l.b16 %v46
    %v329 = vunpack.c.l.b16 %v47
    %v330 = vunpack.c.l.b16 %v48
    %v331 = vunpack.c.l.b16 %v49
    %v332 = vunpack.c.l.b16 %v50
    %v333 = vunpack.c.l.b16 %v51
    %v334 = vunpack.c.l.b16 %v52
    %v335 = vunpack.c.l.b16 %v53
    %v336 = vunpack.c.l.b16 %v54
    %v337 = vunpack.c.l.b16 %v55
    %v338 = vunpack.c.l.b16 %v56
    %v339 = vunpack.c.l.b16 %v57
    %v340 = vunpack.c.l.b16 %v58
    %v341 = vunpack.c.l.b16 %v59
    %v342 = vunpack.c.l.b16 %v60
    %v343 = vunpack.c.l.b16 %v61
    %v344 = vunpack.c.l.b16 %v62
    %v345 = vunpack.c.l.b16 %v63
    %v346 = vunpack.c.l.b16 %v64
    %v347 = vunpack.c.l.b16 %v65
    %v348 = vunpack.c.l.b16 %v66
    %v349 = vunpack.c.l.b16 %v67
    %v350 = vunpack.c.l.b16 %v68
    %v351 = vunpack.c.l.b16 %v69
    %v352 = vunpack.c.l.b16 %v70
    %v353 = vunpack.c.l.b16 %v71
    %v354 = vunpack.c.l.b16 %v72
    %v355 = vunpack.c.l.b16 %v73
    %v356 = vunpack.c.l.b16 %v74
    %v357 = vunpack.c.l.b16 %v75
    %v358 = vunpack.c.l.b16 %v76
    %v359 = vunpack.c.l.b16 %v77
    %v360 = vunpack.c.l.b16 %v78
    %v361 = vunpack.c.l.b16 %v79
    %v362 = vunpack.c.l.b16 %v80
    %v363 = vunpack.c.l.b16 %v81
    %v364 = vunpack.c.l.b16 %v82
    %v365 = vunpack.c.l.b16 %v83
    %v366 = vunpack.c.l.b16 %v84
    %v367 = vunpack.c.l.b16 %v85
    %v368 = vunpack.c.l.b16 %v86
    %v369 = vunpack.c.l.b16 %v87
    %v370 = vunpack.c.l.b16 %v88
    %v371 = vunpack.c.l.b16 %v89
    %v372 = vunpack.c.l.b16 %v90
    %v373 = vunpack.c.l.b16 %v91
    %v374 = vunpack.c.l.b16 %v92
    %v375 = vunpack.c.l.b16 %v93
    %v376 = vunpack.c.l.b16 %v94
    %v377 = vunpack.c.l.b16 %v95
    %v378 = vunpack.c.l.b16 %v96
    %v379 = vunpack.c.l.b16 %v97
    %v380 = vunpack.c.l.b16 %v98
    %v381 = vunpack.c.l.b16 %v99
    %v382 = vunpack.c.l.b16 %v100
    %v383 = vunpack.c.l.b16 %v101
    %v384 = vunpack.c.l.b16 %v102
    %v385 = vunpack.c.l.b16 %v103
    %v386 = vunpack.c.l.b16 %v104
    %v387 = vunpack.c.l.b16 %v105
    %v388 = vunpack.c.l.b16 %v106
    %v389 = vunpack.c.l.b16 %v107
    %v390 = vunpack.c.l.b16 %v108
    %v391 = vunpack.c.l.b16 %v109
    %v392 = vunpack.c.l.b16 %v110
    %v393 = vunpack.c.l.b16 %v111
    %v394 = vunpack.c.l.b16 %v112
    %v395 = vunpack.c.l.b16 %v113
    %v396 = vunpack.c.l.b16 %v114
    %v397 = vunpack.c.l.b16 %v115
    %v398 = vunpack.c.l.b16 %v116
    %v399 = vunpack.c.l.b16 %v117
    %v400 = vunpack.c.l.b16 %v118
    %v401 = vunpack.c.l.b16 %v119
    %v402 = vunpack.c.l.b16 %v120
    %v403 = vunpack.c.l.b16 %v121
    %v404 = vunpack.c.l.b16 %v122
    %v405 = vunpack.c.l.b16 %v123
    %v406 = vunpack.c.l.b16 %v124
    %v407 = vunpack.c.l.b16 %v125
    %v408 = vunpack.c.l.b16 %v126
    %v409 = vunpack.c.l.b16 %v127
    %v410 = vunpack.c.l.b16 %v128
    %v411 = vunpack.c.l.b16 %v129
    %v412 = vunpack.c.l.b16 %v130
    %v413 = vunpack.c.l.b16 %v131
    %v414 = vunpack.c.l.b16 %v132
    %v415 = vunpack.c.l.b16 %v133
    %v416 = vunpack.c.l.b16 %v134
    %v417 = vunpack.c.l.b16 %v135
    %v418 = vunpack.c.l.b16 %v136
    %v419 = vunpack.c.l.b16 %v137
    %v420 = vunpack.c.l.b16 %v138
    %v421 = vunpack.c.l.b16 %v139
    %v422 = vunpack.c.l.b16 %v140
    %v423 = vunpack.c.l.b16 %v141
    %v424 = vunpack.c.l.b16 %v142
    %v425 = vunpack.c.l.b16 %v143
    %v426 = vunpack.c.l.b16 %v144
    %v427 = vunpack.c.l.b16 %v145
    %v428 = vunpack.c.l.b16 %v146
    %v429 = vunpack.c.l.b16 %v147
    %v430 = vunpack.c.l.b16 %v148
    %v431 = vunpack.c.l.b16 %v149
    %v432 = vunpack.c.l.b16 %v150
    %v433 = vunpack.c.l.b16 %v151
    %v434 = vunpack.c.l.b16 %v152
    %v435 = vunpack.c.l.b16 %v153
    %v436 = vunpack.c.l.b16 %v154
    %v437 = vunpack.c.l.b16 %v155
    %v438 = vunpack.c.l.b16 %v156
    %v439 = vunpack.c.l.b16 %v157
    %v440 = vunpack.c.l.b16 %v158
    %v441 = vpack.c.b16 %v314, %v313
    %v442 = vpack.c.b16 %v316, %v315
    %v443 = vpack.c.b16 %v318, %v317
    %v444 = vpack.c.b16 %v320, %v319
    %v445 = vpack.c.b16 %v322, %v321
    %v446 = vpack.c.b16 %v324, %v323
    %v447 = vpack.c.b16 %v326, %v325
    %v448 = vpack.c.b16 %v328, %v327
    %v449 = vpack.c.b16 %v330, %v329
    %v450 = vpack.c.b16 %v332, %v331
    %v451 = vpack.c.b16 %v334, %v333
    %v452 = vpack.c.b16 %v336, %v335
    %v453 = vpack.c.b16 %v338, %v337
    %v454 = vpack.c.b16 %v340, %v339
    %v455 = vpack.c.b16 %v342, %v341
    %v456 = vpack.c.b16 %v344, %v343
    %v457 = vpack.c.b16 %v346, %v345
    %v458 = vpack.c.b16 %v348, %v347
    %v459 = vpack.c.b16 %v350, %v349
    %v460 = vpack.c.b16 %v352, %v351
    %v461 = vpack.c.b16 %v354, %v353
    %v462 = vpack.c.b16 %v356, %v355
    %v463 = vpack.c.b16 %v358, %v357
    %v464 = vpack.c.b16 %v360, %v359
    %v465 = vpack.c.b16 %v362, %v361
    %v466 = vpack.c.b16 %v364, %v363
    %v467 = vpack.c.b16 %v366, %v365
    %v468 = vpack.c.b16 %v368, %v367
    %v469 = vpack.c.b16 %v370, %v369
    %v470 = vpack.c.b16 %v372, %v371
    %v471 = vpack.c.b16 %v374, %v373
    %v472 = vpack.c.b16 %v376, %v375
    %v473 = vpack.c.b16 %v378, %v377
    %v474 = vpack.c.b16 %v380, %v379
    %v475 = vpack.c.b16 %v382, %v381
    %v476 = vpack.c.b16 %v384, %v383
    %v477 = vpack.c.b16 %v386, %v385
    %v478 = vpack.c.b16 %v388, %v387
    %v479 = vpack.c.b16 %v390, %v389
    %v480 = vpack.c.b16 %v392, %v391
    %v481 = vpack.c.b16 %v394, %v393
    %v482 = vpack.c.b16 %v396, %v395
    %v483 = vpack.c.b16 %v398, %v397
    %v484 = vpack.c.b16 %v400, %v399
    %v485 = vpack.c.b16 %v402, %v401
    %v486 = vpack.c.b16 %v404, %v403
    %v487 = vpack.c.b16 %v406, %v405
    %v488 = vpack.c.b16 %v408, %v407
    %v489 = vpack.c.b16 %v410, %v409
    %v490 = vpack.c.b16 %v412, %v411
    %v491 = vpack.c.b16 %v414, %v413
    %v492 = vpack.c.b16 %v416, %v415
    %v493 = vpack.c.b16 %v418, %v417
    %v494 = vpack.c.b16 %v420, %v419
    %v495 = vpack.c.b16 %v422, %v421
    %v496 = vpack.c.b16 %v424, %v423
    %v497 = vpack.c.b16 %v426, %v425
    %v498 = vpack.c.b16 %v428, %v427
    %v499 = vpack.c.b16 %v430, %v429
    %v500 = vpack.c.b16 %v432, %v431
    %v501 = vpack.c.b16 %v434, %v433
    %v502 = vpack.c.b16 %v436, %v435
    %v503 = vpack.c.b16 %v438, %v437
    %v504 = vpack.c.b16 %v440, %v439
    %569 = vmatpush.bf16.msra.mxu0 %v448
    %570 = vmatpush.bf16.msra.mxu0 %v447
    %571 = vmatpush.bf16.msra.mxu0 %v446
    %572 = vmatpush.bf16.msra.mxu0 %v445
    %573 = vmatpush.bf16.msra.mxu0 %v444
    %574 = vmatpush.bf16.msra.mxu0 %v443
    %575 = vmatpush.bf16.msra.mxu0 %v442
    %576 = vmatpush.bf16.msra.mxu0 %v441
    %577 = vmatmul.bf16.gmra.mxu0 %v176
    %v578 = vpop.f32.mrf.mxu0
    %v579 = vadd.f32 %v184, %v578
    %v580 = vpop.f32.mrf.mxu0
    %581 = vdwg.mxu0
    %582 = vmatpush.bf16.msra.mxu0 %v456
    %583 = vmatpush.bf16.msra.mxu0 %v455
    %584 = vmatpush.bf16.msra.mxu0 %v454
    %585 = vmatpush.bf16.msra.mxu0 %v453
    %586 = vmatpush.bf16.msra.mxu0 %v452
    %587 = vmatpush.bf16.msra.mxu0 %v451
    %588 = vmatpush.bf16.msra.mxu0 %v450
    %589 = vmatpush.bf16.msra.mxu0 %v449
    %590 = vmatmul.bf16.gmra.mxu0 %v177
    %v591 = vpop.f32.mrf.mxu0
    %v592 = vadd.f32 %v579, %v591
    %v593 = vpop.f32.mrf.mxu0
    %594 = vdwg.mxu0
    %595 = vmatpush.bf16.msra.mxu0 %v464
    %596 = vmatpush.bf16.msra.mxu0 %v463
    %597 = vmatpush.bf16.msra.mxu0 %v462
    %598 = vmatpush.bf16.msra.mxu0 %v461
    %599 = vmatpush.bf16.msra.mxu0 %v460
    %600 = vmatpush.bf16.msra.mxu0 %v459
    %601 = vmatpush.bf16.msra.mxu0 %v458
    %602 = vmatpush.bf16.msra.mxu0 %v457
    %603 = vmatmul.bf16.gmra.mxu0 %v178
    %v604 = vpop.f32.mrf.mxu0
    %v605 = vadd.f32 %v592, %v604
    %v606 = vpop.f32.mrf.mxu0
    %607 = vdwg.mxu0
    %608 = vmatpush.bf16.msra.mxu0 %v472
    %609 = vmatpush.bf16.msra.mxu0 %v471
    %610 = vmatpush.bf16.msra.mxu0 %v470
    %611 = vmatpush.bf16.msra.mxu0 %v469
    %612 = vmatpush.bf16.msra.mxu0 %v468
    %613 = vmatpush.bf16.msra.mxu0 %v467
    %614 = vmatpush.bf16.msra.mxu0 %v466
    %615 = vmatpush.bf16.msra.mxu0 %v465
    %616 = vmatmul.bf16.gmra.mxu0 %v179
    %v617 = vpop.f32.mrf.mxu0
    %v618 = vadd.f32 %v605, %v617
    %v619 = vpop.f32.mrf.mxu0
    %620 = vdwg.mxu0
    %621 = vmatpush.bf16.msra.mxu0 %v480
    %622 = vmatpush.bf16.msra.mxu0 %v479
    %623 = vmatpush.bf16.msra.mxu0 %v478
    %624 = vmatpush.bf16.msra.mxu0 %v477
    %625 = vmatpush.bf16.msra.mxu0 %v476
    %626 = vmatpush.bf16.msra.mxu0 %v475
    %627 = vmatpush.bf16.msra.mxu0 %v474
    %628 = vmatpush.bf16.msra.mxu0 %v473
    %629 = vmatmul.bf16.gmra.mxu0 %v180
    %v630 = vpop.f32.mrf.mxu0
    %v631 = vadd.f32 %v618, %v630
    %v632 = vpop.f32.mrf.mxu0
    %633 = vdwg.mxu0
    %634 = vmatpush.bf16.msra.mxu0 %v488
    %635 = vmatpush.bf16.msra.mxu0 %v487
    %636 = vmatpush.bf16.msra.mxu0 %v486
    %637 = vmatpush.bf16.msra.mxu0 %v485
    %638 = vmatpush.bf16.msra.mxu0 %v484
    %639 = vmatpush.bf16.msra.mxu0 %v483
    %640 = vmatpush.bf16.msra.mxu0 %v482
    %641 = vmatpush.bf16.msra.mxu0 %v481
    %642 = vmatmul.bf16.gmra.mxu0 %v181
    %v643 = vpop.f32.mrf.mxu0
    %v644 = vadd.f32 %v631, %v643
    %v645 = vpop.f32.mrf.mxu0
    %646 = vdwg.mxu0
    %647 = vmatpush.bf16.msra.mxu0 %v496
    %648 = vmatpush.bf16.msra.mxu0 %v495
    %649 = vmatpush.bf16.msra.mxu0 %v494
    %650 = vmatpush.bf16.msra.mxu0 %v493
    %651 = vmatpush.bf16.msra.mxu0 %v492
    %652 = vmatpush.bf16.msra.mxu0 %v491
    %653 = vmatpush.bf16.msra.mxu0 %v490
    %654 = vmatpush.bf16.msra.mxu0 %v489
    %655 = vmatmul.bf16.gmra.mxu0 %v182
    %v656 = vpop.f32.mrf.mxu0
    %v657 = vadd.f32 %v644, %v656
    %v658 = vpop.f32.mrf.mxu0
    %659 = vdwg.mxu0
    %660 = vmatpush.bf16.msra.mxu0 %v504
    %661 = vmatpush.bf16.msra.mxu0 %v503
    %662 = vmatpush.bf16.msra.mxu0 %v502
    %663 = vmatpush.bf16.msra.mxu0 %v501
    %664 = vmatpush.bf16.msra.mxu0 %v500
    %665 = vmatpush.bf16.msra.mxu0 %v499
    %666 = vmatpush.bf16.msra.mxu0 %v498
    %667 = vmatpush.bf16.msra.mxu0 %v497
    %668 = vmatmul.bf16.gmra.mxu0 %v183
    %v669 = vpop.f32.mrf.mxu0
    %v670 = vadd.f32 %v657, %v669
    %v671 = vpop.f32.mrf.mxu0
    %672 = vdwg.mxu0
    %v673 = vxor.u32 %v670, 2147483648
    %v674 = vmul.f32 %v673, 1.442695
    %v675 = vpow.pop %v674
    %v676 = vadd.f32 %v675, 1.0
    %v677 = vrcp.pop %v676
    %v678 = vmul.f32 %v676, %v677
    %v679 = vsub.f32 1.0, %v678
    %v680 = vmul.f32 %v677, %v679
    %v681 = vadd.f32 %v677, %v680
    %vm682 = vweird.f32 %v676
    %vm683 = vweird.f32 %v677
    %vm684 = vmor %vm682, %vm683
    %v685 = vsel %vm684, %v677, %v681
    %v686 = vand.u32 2147483647, %v676
    %vm687 = vcmp.eq.f32.partialorder %v686, 8.507059e+37
    %v688 = vand.u32 %v676, 2147483648
    %v689 = vor.u32 1.1754944e-38, %v688
    %v690 = vsel %vm687, %v689, %v685
    %v691 = vmul.f32 1.0, %v690
    %v692 = vmax.f32 %v691, 0.25
    %693 = vst [vmem:[%s3] sm:$0x1] %v692
    // Predicated region
    $region18: #{_fwd.1} parent=1 // pred_check
      _
    $region19: #{_fwd.1} parent=1 // pred_check_branch
      %695 = sbr.rel (0) target = $region21
    $region20: #{_fwd.1} parent=1 // pred_region
      _
    $region21: #{_fwd.1} parent=1 // pred_fallthru
      _
    // Predicated region
    $region22: #{_fwd.1} parent=1 // pred_check
      _
    $region23: #{_fwd.1} parent=1 // pred_check_branch
      %697 = sbr.rel (0) target = $region25
    $region24: #{_fwd.1} parent=1 // pred_region
      _
    $region25: #{_fwd.1} parent=1 // pred_fallthru
      _
    %698 = vsyncpa [#allocation3], 1

</llo_original>
